<compile_context>
chip_gen: v7x
topology: tpu7x:2x2x1
jax: 0.10.0
libtpu: 0.0.40
codegen_flags: <defaults>
</compile_context>

<pallas_src>
import functools
import math

import jax
import jax.numpy as jnp
from jax.experimental import pallas as pl
from jax.experimental.pallas import tpu as pltpu


# ---------------------------------------------------------------------------
# Parameter ("buffer") construction — mirrors PositionalEncoding.__init__
# ---------------------------------------------------------------------------
def make_positional_encoding(d_model: int, max_len: int = 5000) -> jnp.ndarray:
    position = jnp.arange(0, max_len, dtype=jnp.float32)[:, None]          # (max_len, 1)
    div_term = jnp.exp(
        jnp.arange(0, d_model, 2, dtype=jnp.float32) * (-math.log(10000.0) / d_model)
    )                                                                       # (d_model//2,)
    pe = jnp.zeros((max_len, d_model), dtype=jnp.float32)
    pe = pe.at[:, 0::2].set(jnp.sin(position * div_term))
    pe = pe.at[:, 1::2].set(jnp.cos(position * div_term))
    # pe.unsqueeze(0).transpose(0, 1)  ->  (max_len, 1, d_model)
    return pe[:, None, :]


# ---------------------------------------------------------------------------
# Pallas kernel: out = x + pe   (lane-dense (TS, B*D) tiles)
# ---------------------------------------------------------------------------
def _pe_add_kernel(x_ref, pe_ref, o_ref, *, batch: int):
    # x_ref / o_ref: (TS, B*D) tile; pe_ref: (TS, D) tile.
    # x row layout is [batch0 d0..dD-1 | batch1 d0..dD-1 | ...], so replicate
    # the pe row `batch` times along the lane axis before the VPU add.
    pe_tile = pe_ref[...]
    if batch > 1:
        pe_tile = jnp.concatenate([pe_tile] * batch, axis=-1)   # (TS, B*D)
    o_ref[...] = x_ref[...] + pe_tile


def _choose_seq_tile(seq_len: int, row_bytes: int,
                     target_bytes: int = 4 * 1024 * 1024) -> int:
    """Pick a sequence-chunk size so each x tile is ~4 MiB (clamped to S)."""
    ts = max(1, target_bytes // max(row_bytes, 1))
    if ts >= seq_len:
        return int(seq_len)          # block equals full dim -> always legal
    if ts >= 8:
        ts -= ts % 8                 # keep the sublane dim a multiple of 8
    return int(ts)


def positional_encoding_forward(x: jnp.ndarray, pe: jnp.ndarray) -> jnp.ndarray:
    """x: (S, B, D); pe: (max_len, 1, D). Returns x + pe[:S] (broadcast over B)."""
    S, B, D = x.shape
    max_len = pe.shape[0]
    assert S <= max_len, "sequence length exceeds positional-encoding buffer"
    assert pe.shape[-1] == D

    # Free (contiguous) reshapes — no HBM copies.
    x2 = x.reshape(S, B * D)
    pe2 = pe.reshape(max_len, D)
    if pe2.dtype != x.dtype:
        # Keep pe in the activation dtype so its HBM traffic / casts match x.
        pe2 = pe2.astype(x.dtype)

    ts = _choose_seq_tile(S, B * D * x.dtype.itemsize)
    grid = (pl.cdiv(S, ts),)

    out2 = pl.pallas_call(
        functools.partial(_pe_add_kernel, batch=B),
        out_shape=jax.ShapeDtypeStruct((S, B * D), x.dtype),
        grid=grid,
        in_specs=[
            pl.BlockSpec((ts, B * D), lambda s: (s, 0)),   # x chunk (contiguous slab)
            pl.BlockSpec((ts, D), lambda s: (s, 0)),       # matching pe rows (no pe[:S] copy)
        ],
        out_specs=pl.BlockSpec((ts, B * D), lambda s: (s, 0)),
        compiler_params=pltpu.CompilerParams(
            dimension_semantics=("parallel",),
            vmem_limit_bytes=32 * 1024 * 1024,   # double-buffered tiles stay well under this
        ),
        # NOTE: input_output_aliases={0: 0} would avoid a second S*B*D buffer,
        # but the caller (demo below) still needs x, so we don't alias here.
    )(x2, pe2)

    return out2.reshape(S, B, D)


# ---------------------------------------------------------------------------
# Demo / correctness check
# ---------------------------------------------------------------------------
if __name__ == "__main__":
    seq_len, batch, d_model = 8, 2, 32
    max_len = 5000

    key = jax.random.PRNGKey(0)
    x = jax.random.normal(key, (seq_len, batch, d_model), dtype=jnp.float32)

    pe = make_positional_encoding(d_model, max_len)

    out = positional_encoding_forward(x, pe)
    out = jax.block_until_ready(out)

    # Pure-JAX reference (mirrors the PyTorch forward exactly)
    ref = x + pe[:seq_len]
    assert out.shape == (seq_len, batch, d_model)
    assert out.dtype == x.dtype
    assert jnp.allclose(out, ref, atol=1e-6, rtol=1e-6)

    print("KERNEL_OK")
</pallas_src>

<mosaic_0001>
module attributes {stable_mosaic.version = 11 : i64} {
  func.func @_pe_add_kernel(%arg0: i32, %arg1: memref<8x64xf32, #tpu.memory_space<vmem>>, %arg2: memref<8x32xf32, #tpu.memory_space<vmem>>, %arg3: memref<8x64xf32, #tpu.memory_space<vmem>>) attributes {dimension_semantics = [#tpu.dimension_semantics<parallel>], iteration_bounds = array<i64: 1>, scalar_prefetch = 0 : i64, scratch_operands = 0 : i64, tpu.core_type = #tpu.core_type<tc>, window_params = [{transform_indices = @transform_0, window_bounds = array<i64: 8, 64>}, {transform_indices = @transform_1, window_bounds = array<i64: 8, 32>}, {transform_indices = @transform_2, window_bounds = array<i64: 8, 64>}]} {
    %c0 = arith.constant 0 : index
    %c0_0 = arith.constant 0 : index
    %0 = vector.load %arg2[%c0, %c0_0] : memref<8x32xf32, #tpu.memory_space<vmem>>, vector<8x32xf32>
    %1 = tpu.concatenate %0, %0 in 1 : vector<8x32xf32>, vector<8x32xf32> -> vector<8x64xf32>
    %c0_1 = arith.constant 0 : index
    %c0_2 = arith.constant 0 : index
    %2 = vector.load %arg1[%c0_1, %c0_2] : memref<8x64xf32, #tpu.memory_space<vmem>>, vector<8x64xf32>
    %3 = arith.addf %2, %1 : vector<8x64xf32>
    %c0_3 = arith.constant 0 : index
    %c0_4 = arith.constant 0 : index
    %4 = vector.load %arg3[%c0_3, %c0_4] : memref<8x64xf32, #tpu.memory_space<vmem>>, vector<8x64xf32>
    tpu.vector_store %arg3[%c0_3, %c0_4], %3 {strides = array<i32>} : memref<8x64xf32, #tpu.memory_space<vmem>>, vector<8x64xf32>,
    return
  }
  func.func @transform_0(%arg0: i32) -> (i32, i32) {
    %c0_i32 = arith.constant 0 : i32
    %c0_i32_0 = arith.constant 0 : i32
    return %arg0, %c0_i32 : i32, i32
  }
  func.func @transform_1(%arg0: i32) -> (i32, i32) {
    %c0_i32 = arith.constant 0 : i32
    %c0_i32_0 = arith.constant 0 : i32
    return %arg0, %c0_i32 : i32, i32
  }
  func.func @transform_2(%arg0: i32) -> (i32, i32) {
    %c0_i32 = arith.constant 0 : i32
    %c0_i32_0 = arith.constant 0 : i32
    return %arg0, %c0_i32 : i32, i32
  }
}

</mosaic_0001>

<llo_original>
// kernel: tpu_custom_call.1
$region0: #{tpu_custom_call.1}
  #allocation0 [shape = 'u32[]', space=smem, size = 0x4, offset = 0x4, fixed_abs, tag = 'smem constant byte address 0x4 - core index']
  #allocation1 [shape = 'u32[144,128]{1,0:T(1,128)}', space=vmem, size = 0x12000, scoped, tag = 'internal scratch']
  %s0 = inlined_call_operand.vmem [shape: f32[8,64], index: 0, kind: input, shape index: {}]
  %s1 = inlined_call_operand.vmem [shape: f32[5000,32], index: 1, kind: input, shape index: {}]
  %s2 = inlined_call_operand.hbm [shape: f32[8,64], index: 2, kind: output, shape index: {}]
  %s3 = sld [smem:[#allocation0]]
  $region18: #{tpu_custom_call.1} parent=0
    _
  %s5 = ssub.s32 1, %s3
  %s6 = scalar_select 0, %s5, %s3
  $region1: #{tpu_custom_call.1} parent=0
    #allocation2 [shape = 'u8[4096]{0}', space=vmem, size = 0x1000, scoped, tag = 'output window, operand 0, single buffered']
    #allocation3 [shape = 's32[1]{0}', space=sflag, size = 0x4, scoped, tag = 'scoped memory for tpu_custom_call.1']
    %7 = vsyncpa [#allocation3], 0
    // Predicated region
    $region2: #{tpu_custom_call.1} parent=1 // pred_check
      _
    $region3: #{tpu_custom_call.1} parent=1 // pred_check_branch
      %9 = sbr.rel (0) target = $region5
    $region4: #{tpu_custom_call.1} parent=1 // pred_region
      _
    $region5: #{tpu_custom_call.1} parent=1 // pred_fallthru
      _
    // Predicated region
    $region6: #{tpu_custom_call.1} parent=1 // pred_check
      _
    $region7: #{tpu_custom_call.1} parent=1 // pred_check_branch
      %11 = sbr.rel (0) target = $region9
    $region8: #{tpu_custom_call.1} parent=1 // pred_region
      _
    $region9: #{tpu_custom_call.1} parent=1 // pred_fallthru
      _
    %v12 = vld [vmem:[%s1] sm:$0xff]
    %14 = vrot.lane.b32.xlu0 %v12, 32
    %v15 = vpop.permute.xlu0 %14
    %vm17 = vcmask 261120
    %v18 = vsel %vm17, %v12, %v15
    %v19 = vld [vmem:[%s0] sm:$0xff]
    %v20 = vadd.f32 %v19, %v18
    %vm21 = vcmask 523264
    %22 = vst.msk [vmem:[#allocation2] sm:$0xff] %vm21, %v20
    // Predicated region
    $region10: #{tpu_custom_call.1} parent=1 // pred_check
      _
    $region11: #{tpu_custom_call.1} parent=1 // pred_check_branch
      %24 = sbr.rel (0) target = $region13
    $region12: #{tpu_custom_call.1} parent=1 // pred_region
      %s26 = ssub.s32 128, 128
      %27 = vsyncadd [#allocation3], %s26
      %s29 = sshll.u32 [#allocation2], 4
      %s30 = int_to_ptr.vmem [resolvable:$true] %s29
      %32 = dma.vmem_to_hbm [thread:$0]  %s30, 128, %s2, [#allocation3]
    $region13: #{tpu_custom_call.1} parent=1 // pred_fallthru
      _
    // Predicated region
    $region14: #{tpu_custom_call.1} parent=1 // pred_check
      _
    $region15: #{tpu_custom_call.1} parent=1 // pred_check_branch
      %34 = sbr.rel (0) target = $region17
    $region16: #{tpu_custom_call.1} parent=1 // pred_region
      %35 = dma.done [#allocation3], 128
    $region17: #{tpu_custom_call.1} parent=1 // pred_fallthru
      _
    %36 = vsyncpa [#allocation3], 1

</llo_original>
